<compile_context>
chip_gen: v5e
topology: v5e:2x2
jax: 0.10.0
libtpu: 0.0.40
codegen_flags: <defaults>
</compile_context>

<pallas_src>
import jax
import jax.numpy as jnp
from jax.experimental import pallas as pl
from jax.experimental.pallas import tpu as pltpu

# ---------------- small demo config (consistent with ModelConfig fields) ------
B = 2                                   # batch
D_MODEL = 32                            # config.d_model
POOL_FACTOR = 2                         # config.repa_pool_factor
SAMPLE_SIZE = 256                       # config.sample_size
PATCH_SIZE = 16                         # config.patch_size
N_PATCHES = SAMPLE_SIZE // PATCH_SIZE   # 16
SEQ = N_PATCHES * N_PATCHES             # 256 tokens in `features`
POOLED_SEQ = SEQ // (POOL_FACTOR ** 2)  # 64 tokens after patch_pool
D_IN = D_MODEL * POOL_FACTOR ** 2       # 128 = MLP input dim
D_MID = D_MODEL * 4                     # 128 = MLP hidden dim
DINO_HIDDEN = 384                       # DINOv2-small hidden size
IMG = 64                                # raw image spatial size (resized to 224)
DINO_PATCH = 28                         # stand-in patch size -> (224/28)^2 = 64 tokens
N_DINO_TOKENS = (224 // DINO_PATCH) ** 2  # 64, matches POOLED_SEQ


# ---------------- Pallas kernel: MLP + cosine-sim + mean (single block) ------
def _repa_loss_kernel(feat_ref, h_ref, w1_ref, b1_ref, w2_ref, b2_ref, out_ref):
    # feat_ref: (B*N, D_IN)  bf16      h_ref: (B*N, D_OUT) bf16
    # w1:(D_IN,D_MID) bf16  b1:(1,D_MID) f32  w2:(D_MID,D_OUT) bf16  b2:(1,D_OUT) f32
    feat = feat_ref[...]

    # MLP projector: Linear -> GELU -> Linear (bf16 MXU matmuls, f32 accumulation)
    # TODO(synk): MLP class definition is not in the spec; a standard 2-layer MLP
    # with tanh-approx GELU is assumed (PyTorch nn.GELU() default is exact erf).
    z = jnp.dot(feat, w1_ref[...], preferred_element_type=jnp.float32) + b1_ref[...]
    z = jax.nn.gelu(z)
    h_rft = jnp.dot(z.astype(w2_ref.dtype), w2_ref[...],
                    preferred_element_type=jnp.float32) + b2_ref[...]

    h = h_ref[...].astype(jnp.float32)

    # cosine similarity via row dots + rsqrt (equivalent to F.normalize + einsum,
    # eps = 1e-12); no divides, no normalized (N, 384) temporaries.
    dot = jnp.sum(h * h_rft, axis=-1, keepdims=True)
    nh = jnp.sum(h * h, axis=-1, keepdims=True)
    nr = jnp.sum(h_rft * h_rft, axis=-1, keepdims=True)
    eps2 = jnp.float32(1e-24)                       # (1e-12)^2
    cos = dot * jax.lax.rsqrt(jnp.maximum(nh * nr, eps2))

    n_rows = feat_ref.shape[0]                      # static B*N
    out_ref[0] = -jnp.sum(cos) / jnp.float32(n_rows)


def pallas_repa_loss(feats, h, w1, b1, w2, b2):
    bb, n, d_in = feats.shape
    d_out = h.shape[-1]
    d_mid = w1.shape[-1]
    bn = bb * n

    # Flatten batch into the token axis and cast matmul operands to bf16 in the
    # wrapper so the kernel sees a single lane-dense block per operand.
    feats2 = feats.reshape(bn, d_in).astype(jnp.bfloat16)
    h2 = h.reshape(bn, d_out).astype(jnp.bfloat16)
    w1b = w1.astype(jnp.bfloat16)
    w2b = w2.astype(jnp.bfloat16)
    b1f = b1.astype(jnp.float32)
    b2f = b2.astype(jnp.float32)

    flops = 2 * bn * d_in * d_mid + 2 * bn * d_mid * d_out
    transcendentals = bn * d_mid + bn               # gelu(tanh) + rsqrt
    bytes_accessed = (feats2.size * 2 + h2.size * 2 + w1b.size * 2 + w2b.size * 2
                      + b1f.size * 4 + b2f.size * 4 + 4)

    out = pl.pallas_call(
        _repa_loss_kernel,
        out_shape=jax.ShapeDtypeStruct((1,), jnp.float32),
        in_specs=[pl.BlockSpec(memory_space=pltpu.MemorySpace.VMEM)] * 6,
        out_specs=pl.BlockSpec(memory_space=pltpu.MemorySpace.SMEM),
        cost_estimate=pl.CostEstimate(flops=flops,
                                      transcendentals=transcendentals,
                                      bytes_accessed=bytes_accessed),
    )(feats2, h2, w1b, b1f, w2b, b2f)
    return out[0]


# ---------------- JAX glue (reshapes / preprocessing, no hot compute) --------
def patch_pool(x, n_patches):
    """Exact port of patch_pool: [b, n, d] -> [b, n/4, 4d]."""
    b, n, d = x.shape
    xg = x.reshape(b, n_patches, n_patches, d)
    top = xg[:, ::2].reshape(b, -1, d)
    bot = xg[:, 1::2].reshape(b, -1, d)
    tl, tr = top[:, ::2], top[:, 1::2]
    bl, br = bot[:, ::2], bot[:, 1::2]
    return jnp.concatenate([tl, tr, bl, br], axis=-1)


def dino_proc(x):
    """[-1,1] NCHW image -> ImageNet-normalized 224x224 NCHW."""
    x = (x + 1.0) / 2.0
    b = x.shape[0]
    # bilinear upsample, half-pixel centers == F.interpolate(align_corners=False)
    x = jax.image.resize(x, (b, 3, 224, 224), method='bilinear')
    mean = jnp.array([0.485, 0.456, 0.406], jnp.float32).reshape(1, 3, 1, 1)
    std = jnp.array([0.229, 0.224, 0.225], jnp.float32).reshape(1, 3, 1, 1)
    return (x - mean) / std


def synthetic_dino_features(img, w_embed):
    # TODO(synk): the frozen pretrained DINOv2 transformer (hidden_states[-2][:, 1:])
    # has no Pallas equivalent; stand-in is a deterministic linear patch-embedding
    # of the preprocessed 224x224 image producing [B, 64, 384] tokens.
    b = img.shape[0]
    g = 224 // DINO_PATCH
    p = img.reshape(b, 3, g, DINO_PATCH, g, DINO_PATCH)
    p = p.transpose(0, 2, 4, 1, 3, 5).reshape(b, g * g, 3 * DINO_PATCH * DINO_PATCH)
    return p @ w_embed


def repa_forward(x, features, params):
    feats = patch_pool(features, N_PATCHES)          # pool_factor > 1 branch
    h = synthetic_dino_features(dino_proc(x), params["w_dino"])
    return pallas_repa_loss(feats, h,
                            params["w1"], params["b1"],
                            params["w2"], params["b2"])


# ---------------- main --------------------------------------------------------
if __name__ == "__main__":
    key = jax.random.PRNGKey(0)
    k1, k2, k3, k4, k5, k6, k7 = jax.random.split(key, 7)

    # inputs
    x = jax.random.uniform(k1, (B, 3, IMG, IMG), jnp.float32, -1.0, 1.0)
    features = jax.random.normal(k2, (B, SEQ, D_MODEL), jnp.float32)

    # deterministic parameters (shapes per REPA.__init__)
    params = {
        "w1": jax.random.normal(k3, (D_IN, D_MID), jnp.float32) * 0.02,
        "b1": jax.random.normal(k4, (1, D_MID), jnp.float32) * 0.02,
        "w2": jax.random.normal(k5, (D_MID, DINO_HIDDEN), jnp.float32) * 0.02,
        "b2": jax.random.normal(k6, (1, DINO_HIDDEN), jnp.float32) * 0.02,
        "w_dino": jax.random.normal(
            k7, (3 * DINO_PATCH * DINO_PATCH, DINO_HIDDEN), jnp.float32) * 0.02,
    }

    loss = jax.block_until_ready(repa_forward(x, features, params))

    # -------- plain-JAX reference with identical numerics (bf16 matmuls) ------
    feats = patch_pool(features, N_PATCHES)
    h = synthetic_dino_features(dino_proc(x), params["w_dino"])
    bn = B * POOLED_SEQ
    f2 = feats.reshape(bn, D_IN).astype(jnp.bfloat16)
    h2 = h.reshape(bn, DINO_HIDDEN).astype(jnp.bfloat16).astype(jnp.float32)
    z = jax.nn.gelu(jnp.dot(f2, params["w1"].astype(jnp.bfloat16),
                            preferred_element_type=jnp.float32) + params["b1"])
    hr = jnp.dot(z.astype(jnp.bfloat16), params["w2"].astype(jnp.bfloat16),
                 preferred_element_type=jnp.float32) + params["b2"]
    dot = jnp.sum(h2 * hr, -1)
    nrm = jnp.maximum(jnp.sum(h2 * h2, -1) * jnp.sum(hr * hr, -1), 1e-24)
    ref_bf16 = -jnp.mean(dot * jax.lax.rsqrt(nrm))
    assert jnp.allclose(loss, ref_bf16, atol=1e-4, rtol=1e-4), (float(loss), float(ref_bf16))

    # -------- loose check against a full-f32 (PyTorch-faithful) reference -----
    zf = jax.nn.gelu(feats.reshape(bn, D_IN) @ params["w1"] + params["b1"])
    hrf = zf @ params["w2"] + params["b2"]
    hf = h.reshape(bn, DINO_HIDDEN)
    hn = hf / jnp.maximum(jnp.linalg.norm(hf, axis=-1, keepdims=True), 1e-12)
    rn = hrf / jnp.maximum(jnp.linalg.norm(hrf, axis=-1, keepdims=True), 1e-12)
    ref_f32 = -jnp.mean(jnp.sum(hn * rn, axis=-1))
    assert jnp.allclose(loss, ref_f32, atol=1e-2), (float(loss), float(ref_f32))

    print("KERNEL_OK")
</pallas_src>

<mosaic_0001>
module attributes {stable_mosaic.version = 11 : i64} {
  func.func @_repa_loss_kernel(%arg0: memref<128x128xbf16, #tpu.memory_space<vmem>>, %arg1: memref<128x384xbf16, #tpu.memory_space<vmem>>, %arg2: memref<128x128xbf16, #tpu.memory_space<vmem>>, %arg3: memref<1x128xf32, #tpu.memory_space<vmem>>, %arg4: memref<128x384xbf16, #tpu.memory_space<vmem>>, %arg5: memref<1x384xf32, #tpu.memory_space<vmem>>, %arg6: memref<1xf32, #tpu.memory_space<smem>>) attributes {dimension_semantics = [], scalar_prefetch = 0 : i64, scratch_operands = 0 : i64, tpu.core_type = #tpu.core_type<tc>} {
    %c0 = arith.constant 0 : index
    %c0_0 = arith.constant 0 : index
    %0 = vector.load %arg0[%c0, %c0_0] : memref<128x128xbf16, #tpu.memory_space<vmem>>, vector<128x128xbf16>
    %c0_1 = arith.constant 0 : index
    %c0_2 = arith.constant 0 : index
    %1 = vector.load %arg2[%c0_1, %c0_2] : memref<128x128xbf16, #tpu.memory_space<vmem>>, vector<128x128xbf16>
    %cst = arith.constant dense<0.000000e+00> : vector<128x128xf32>
    %2 = tpu.matmul %0, %1, %cst {dimension_numbers = #tpu.dot_dimension_numbers<[1], [0], [0], [1], [0, 0, 1, 1], [], []>} : vector<128x128xbf16>, vector<128x128xbf16>, vector<128x128xf32> -> vector<128x128xf32>
    %c0_3 = arith.constant 0 : index
    %c0_4 = arith.constant 0 : index
    %3 = vector.load %arg3[%c0_3, %c0_4] : memref<1x128xf32, #tpu.memory_space<vmem>>, vector<1x128xf32>
    %4 = vector.broadcast %3 : vector<1x128xf32> to vector<128x128xf32>
    %5 = arith.addf %2, %4 : vector<128x128xf32>
    %6 = arith.mulf %5, %5 : vector<128x128xf32>
    %7 = arith.mulf %5, %6 : vector<128x128xf32>
    %cst_5 = arith.constant 4.471500e-02 : f32
    %8 = vector.broadcast %cst_5 : f32 to vector<128x128xf32>
    %9 = arith.mulf %8, %7 : vector<128x128xf32>
    %10 = arith.addf %5, %9 : vector<128x128xf32>
    %cst_6 = arith.constant 0.797884583 : f32
    %11 = vector.broadcast %cst_6 : f32 to vector<128x128xf32>
    %12 = arith.mulf %11, %10 : vector<128x128xf32>
    %13 = math.tanh %12 : vector<128x128xf32>
    %cst_7 = arith.constant 1.000000e+00 : f32
    %14 = vector.broadcast %cst_7 : f32 to vector<128x128xf32>
    %15 = arith.addf %14, %13 : vector<128x128xf32>
    %cst_8 = arith.constant 5.000000e-01 : f32
    %16 = vector.broadcast %cst_8 : f32 to vector<128x128xf32>
    %17 = arith.mulf %16, %15 : vector<128x128xf32>
    %18 = arith.mulf %5, %17 : vector<128x128xf32>
    %19 = arith.truncf %18 : vector<128x128xf32> to vector<128x128xbf16>
    %c0_9 = arith.constant 0 : index
    %c0_10 = arith.constant 0 : index
    %20 = vector.load %arg4[%c0_9, %c0_10] : memref<128x384xbf16, #tpu.memory_space<vmem>>, vector<128x384xbf16>
    %cst_11 = arith.constant dense<0.000000e+00> : vector<128x384xf32>
    %21 = tpu.matmul %19, %20, %cst_11 {dimension_numbers = #tpu.dot_dimension_numbers<[1], [0], [0], [1], [0, 0, 1, 1], [], []>} : vector<128x128xbf16>, vector<128x384xbf16>, vector<128x384xf32> -> vector<128x384xf32>
    %c0_12 = arith.constant 0 : index
    %c0_13 = arith.constant 0 : index
    %22 = vector.load %arg5[%c0_12, %c0_13] : memref<1x384xf32, #tpu.memory_space<vmem>>, vector<1x384xf32>
    %23 = vector.broadcast %22 : vector<1x384xf32> to vector<128x384xf32>
    %24 = arith.addf %21, %23 : vector<128x384xf32>
    %c0_14 = arith.constant 0 : index
    %c0_15 = arith.constant 0 : index
    %25 = vector.load %arg1[%c0_14, %c0_15] : memref<128x384xbf16, #tpu.memory_space<vmem>>, vector<128x384xbf16>
    %26 = arith.extf %25 : vector<128x384xbf16> to vector<128x384xf32>
    %27 = arith.mulf %26, %24 : vector<128x384xf32>
    %cst_16 = arith.constant dense<0.000000e+00> : vector<128xf32>
    %28 = vector.multi_reduction <add>, %27, %cst_16 [1] : vector<128x384xf32> to vector<128xf32>
    %29 = vector.shape_cast %28 : vector<128xf32> to vector<128x1xf32>
    %30 = arith.mulf %26, %26 : vector<128x384xf32>
    %cst_17 = arith.constant dense<0.000000e+00> : vector<128xf32>
    %31 = vector.multi_reduction <add>, %30, %cst_17 [1] : vector<128x384xf32> to vector<128xf32>
    %32 = vector.shape_cast %31 : vector<128xf32> to vector<128x1xf32>
    %33 = arith.mulf %24, %24 : vector<128x384xf32>
    %cst_18 = arith.constant dense<0.000000e+00> : vector<128xf32>
    %34 = vector.multi_reduction <add>, %33, %cst_18 [1] : vector<128x384xf32> to vector<128xf32>
    %35 = vector.shape_cast %34 : vector<128xf32> to vector<128x1xf32>
    %36 = arith.mulf %32, %35 : vector<128x1xf32>
    %cst_19 = arith.constant 1.000000e-24 : f32
    %37 = vector.broadcast %cst_19 : f32 to vector<128x1xf32>
    %38 = arith.maximumf %36, %37 : vector<128x1xf32>
    %39 = math.rsqrt %38 : vector<128x1xf32>
    %40 = arith.mulf %29, %39 : vector<128x1xf32>
    %41 = vector.shape_cast %40 : vector<128x1xf32> to vector<1x128x1xf32>
    %cst_20 = arith.constant dense<0.000000e+00> : vector<1xf32>
    %42 = vector.multi_reduction <add>, %41, %cst_20 [1, 2] : vector<1x128x1xf32> to vector<1xf32>
    %43 = vector.shape_cast %42 : vector<1xf32> to vector<1x1x1xf32>
    %44 = vector.extract %43[0, 0, 0] : f32 from vector<1x1x1xf32>
    %cst_21 = arith.constant 0.000000e+00 : f32
    %45 = arith.subf %cst_21, %44 : f32
    %cst_22 = arith.constant 1.280000e+02 : f32
    %46 = arith.divf %45, %cst_22 : f32
    %c0_23 = arith.constant 0 : index
    %47 = memref.load %arg6[%c0_23] : memref<1xf32, #tpu.memory_space<smem>>
    memref.store %46, %arg6[%c0_23] : memref<1xf32, #tpu.memory_space<smem>>
    return
  }
}

</mosaic_0001>

<llo_original>
// kernel: tpu_custom_call.1
$region0: #{tpu_custom_call.1}
  #allocation0 [shape = 'u32[]', space=smem, size = 0x4, offset = 0x4, fixed_abs, tag = 'smem constant byte address 0x4 - core index']
  #allocation1 [shape = 'u32[72,128]{1,0:T(1,128)}', space=vmem, size = 0x9000, scoped, tag = 'internal scratch']
  %s0 = inlined_call_operand.hbm [shape: bf16[128,128], index: 0, kind: input, shape index: {}]
  %s1 = inlined_call_operand.hbm [shape: bf16[128,384], index: 1, kind: input, shape index: {}]
  %s2 = inlined_call_operand.hbm [shape: bf16[128,128], index: 2, kind: input, shape index: {}]
  %s3 = inlined_call_operand.vmem [shape: f32[1,128], index: 3, kind: input, shape index: {}]
  %s4 = inlined_call_operand.hbm [shape: bf16[128,384], index: 4, kind: input, shape index: {}]
  %s5 = inlined_call_operand.vmem [shape: f32[1,384], index: 5, kind: input, shape index: {}]
  %s6 = inlined_call_operand.hbm [shape: f32[1], index: 6, kind: output, shape index: {}]
  %s7 = sld [smem:[#allocation0]]
  $region50: #{tpu_custom_call.1} parent=0
    _
  %s9 = ssub.s32 1, %s7
  %s10 = scalar_select 0, %s9, %s7
  $region1: #{tpu_custom_call.1} parent=0
    #allocation2 [shape = 'u8[32768]{0}', space=vmem, size = 0x8000, scoped, tag = 'input window, operand 0, single buffered']
    #allocation3 [shape = 's32[1]{0}', space=sflag, size = 0x4, scoped, tag = 'scoped memory for tpu_custom_call.1']
    #allocation4 [shape = 's32[1]{0}', space=sflag, size = 0x4, scoped, tag = 'scoped memory for tpu_custom_call.1']
    #allocation5 [shape = 'u8[98304]{0}', space=vmem, size = 0x18000, scoped, tag = 'input window, operand 1, single buffered']
    #allocation6 [shape = 's32[1]{0}', space=sflag, size = 0x4, scoped, tag = 'scoped memory for tpu_custom_call.1']
    #allocation7 [shape = 'u8[32768]{0}', space=vmem, size = 0x8000, scoped, tag = 'input window, operand 2, single buffered']
    #allocation8 [shape = 'u8[98304]{0}', space=vmem, size = 0x18000, scoped, tag = 'input window, operand 4, single buffered']
    #allocation9 [shape = 's32[1]{0}', space=sflag, size = 0x4, scoped, tag = 'scoped memory for tpu_custom_call.1']
    #allocation10 [shape = 'u8[512]{0}', space=smem, size = 0x200, scoped, tag = 'output window, operand 0, single buffered']
    %11 = vsyncpa [#allocation3], 0
    %12 = vsyncpa [#allocation6], 0
    %13 = vsyncpa [#allocation9], 0
    %14 = vsyncpa [#allocation4], 0
    // Predicated region
    $region2: #{tpu_custom_call.1} parent=1 // pred_check
      _
    $region3: #{tpu_custom_call.1} parent=1 // pred_check_branch
      %16 = sbr.rel (0) target = $region5
    $region4: #{tpu_custom_call.1} parent=1 // pred_region
      %18 = vsyncadd [#allocation3], 0
      %s19 = sshll.u32 %s0, 4
      %s20 = int_to_ptr.hbm [resolvable:$true] %s19
      %s21 = sshll.u32 [#allocation2], 4
      %s22 = int_to_ptr.vmem [resolvable:$true] %s21
      %27 = dma.hbm_to_vmem [thread:$0]  %s20, 1024, %s22, [#allocation3], 64, 64, 4
    $region5: #{tpu_custom_call.1} parent=1 // pred_fallthru
      _
    // Predicated region
    $region6: #{tpu_custom_call.1} parent=1 // pred_check
      _
    $region7: #{tpu_custom_call.1} parent=1 // pred_check_branch
      %29 = sbr.rel (0) target = $region9
    $region8: #{tpu_custom_call.1} parent=1 // pred_region
      %31 = vsyncadd [#allocation6], 0
      %s32 = sshll.u32 %s1, 4
      %s33 = int_to_ptr.hbm [resolvable:$true] %s32
      %s34 = sshll.u32 [#allocation5], 4
      %s35 = int_to_ptr.vmem [resolvable:$true] %s34
      %40 = dma.hbm_to_vmem [thread:$0]  %s33, 3072, %s35, [#allocation6], 192, 192, 12
    $region9: #{tpu_custom_call.1} parent=1 // pred_fallthru
      _
    // Predicated region
    $region10: #{tpu_custom_call.1} parent=1 // pred_check
      _
    $region11: #{tpu_custom_call.1} parent=1 // pred_check_branch
      %42 = sbr.rel (0) target = $region13
    $region12: #{tpu_custom_call.1} parent=1 // pred_region
      %44 = vsyncadd [#allocation6], 0
      %s45 = sshll.u32 %s2, 4
      %s46 = int_to_ptr.hbm [resolvable:$true] %s45
      %s47 = sshll.u32 [#allocation7], 4
      %s48 = int_to_ptr.vmem [resolvable:$true] %s47
      %53 = dma.hbm_to_vmem [thread:$0]  %s46, 1024, %s48, [#allocation6], 64, 64, 4
    $region13: #{tpu_custom_call.1} parent=1 // pred_fallthru
      _
    // Predicated region
    $region14: #{tpu_custom_call.1} parent=1 // pred_check
      _
    $region15: #{tpu_custom_call.1} parent=1 // pred_check_branch
      %55 = sbr.rel (0) target = $region17
    $region16: #{tpu_custom_call.1} parent=1 // pred_region
      _
    $region17: #{tpu_custom_call.1} parent=1 // pred_fallthru
      _
    // Predicated region
    $region18: #{tpu_custom_call.1} parent=1 // pred_check
      _
    $region19: #{tpu_custom_call.1} parent=1 // pred_check_branch
      %57 = sbr.rel (0) target = $region21
    $region20: #{tpu_custom_call.1} parent=1 // pred_region
      %59 = vsyncadd [#allocation9], 0
      %s60 = sshll.u32 %s4, 4
      %s61 = int_to_ptr.hbm [resolvable:$true] %s60
      %s62 = sshll.u32 [#allocation8], 4
      %s63 = int_to_ptr.vmem [resolvable:$true] %s62
      %68 = dma.hbm_to_vmem [thread:$0]  %s61, 3072, %s63, [#allocation9], 192, 192, 12
    $region21: #{tpu_custom_call.1} parent=1 // pred_fallthru
      _
    // Predicated region
    $region22: #{tpu_custom_call.1} parent=1 // pred_check
      _
    $region23: #{tpu_custom_call.1} parent=1 // pred_check_branch
      %70 = sbr.rel (0) target = $region25
    $region24: #{tpu_custom_call.1} parent=1 // pred_region
      _
    $region25: #{tpu_custom_call.1} parent=1 // pred_fallthru
      _
    // Predicated region
    $region26: #{tpu_custom_call.1} parent=1 // pred_check
      _
    $region27: #{tpu_custom_call.1} parent=1 // pred_check_branch
      %72 = sbr.rel (0) target = $region29
    $region28: #{tpu_custom_call.1} parent=1 // pred_region
      %74 = dma.done [#allocation3], 1024
    $region29: #{tpu_custom_call.1} parent=1 // pred_fallthru
      _
    // Predicated region
    $region30: #{tpu_custom_call.1} parent=1 // pred_check
      _
    $region31: #{tpu_custom_call.1} parent=1 // pred_check_branch
      %76 = sbr.rel (0) target = $region33
    $region32: #{tpu_custom_call.1} parent=1 // pred_region
      %78 = dma.done [#allocation6], 3072
    $region33: #{tpu_custom_call.1} parent=1 // pred_fallthru
      _
    // Predicated region
    $region34: #{tpu_custom_call.1} parent=1 // pred_check
      _
    $region35: #{tpu_custom_call.1} parent=1 // pred_check_branch
      %80 = sbr.rel (0) target = $region37
    $region36: #{tpu_custom_call.1} parent=1 // pred_region
      %82 = dma.done [#allocation6], 1024
    $region37: #{tpu_custom_call.1} parent=1 // pred_fallthru
      _
    // Predicated region
    $region38: #{tpu_custom_call.1} parent=1 // pred_check
      _
    $region39: #{tpu_custom_call.1} parent=1 // pred_check_branch
      %84 = sbr.rel (0) target = $region41
    $region40: #{tpu_custom_call.1} parent=1 // pred_region
      %86 = dma.done [#allocation9], 3072
    $region41: #{tpu_custom_call.1} parent=1 // pred_fallthru
      _
    %v87 = vld [vmem:[#allocation2] sm:$0xf]
    %v88 = vld [vmem:[#allocation2 + $0x4] sm:$0xf]
    %v89 = vld [vmem:[#allocation2 + $0x8] sm:$0xf]
    %v90 = vld [vmem:[#allocation2 + $0xc] sm:$0xf]
    %v91 = vld [vmem:[#allocation2 + $0x10] sm:$0xf]
    %v92 = vld [vmem:[#allocation2 + $0x14] sm:$0xf]
    %v93 = vld [vmem:[#allocation2 + $0x18] sm:$0xf]
    %v94 = vld [vmem:[#allocation2 + $0x1c] sm:$0xf]
    %v95 = vld [vmem:[#allocation2 + $0x20] sm:$0xf]
    %v96 = vld [vmem:[#allocation2 + $0x24] sm:$0xf]
    %v97 = vld [vmem:[#allocation2 + $0x28] sm:$0xf]
    %v98 = vld [vmem:[#allocation2 + $0x2c] sm:$0xf]
    %v99 = vld [vmem:[#allocation2 + $0x30] sm:$0xf]
    %v100 = vld [vmem:[#allocation2 + $0x34] sm:$0xf]
    %v101 = vld [vmem:[#allocation2 + $0x38] sm:$0xf]
    %v102 = vld [vmem:[#allocation2 + $0x3c] sm:$0xf]
    %v103 = vld [vmem:[#allocation7] sm:$0xf]
    %v104 = vld [vmem:[#allocation7 + $0x4] sm:$0xf]
    %v105 = vld [vmem:[#allocation7 + $0x8] sm:$0xf]
    %v106 = vld [vmem:[#allocation7 + $0xc] sm:$0xf]
    %v107 = vld [vmem:[#allocation7 + $0x10] sm:$0xf]
    %v108 = vld [vmem:[#allocation7 + $0x14] sm:$0xf]
    %v109 = vld [vmem:[#allocation7 + $0x18] sm:$0xf]
    %v110 = vld [vmem:[#allocation7 + $0x1c] sm:$0xf]
    %v111 = vld [vmem:[#allocation7 + $0x20] sm:$0xf]
    %v112 = vld [vmem:[#allocation7 + $0x24] sm:$0xf]
    %v113 = vld [vmem:[#allocation7 + $0x28] sm:$0xf]
    %v114 = vld [vmem:[#allocation7 + $0x2c] sm:$0xf]
    %v115 = vld [vmem:[#allocation7 + $0x30] sm:$0xf]
    %v116 = vld [vmem:[#allocation7 + $0x34] sm:$0xf]
    %v117 = vld [vmem:[#allocation7 + $0x38] sm:$0xf]
    %v118 = vld [vmem:[#allocation7 + $0x3c] sm:$0xf]
    %v119 = vld [vmem:[%s3] sm:$0x1]
    %v121 = vperm.slane %v119, 0
    %v139 = vunpack.c.l.b16 %v87
    %v140 = vunpack.c.l.b16 %v88
    %v141 = vunpack.c.l.b16 %v89
    %v142 = vunpack.c.l.b16 %v90
    %v143 = vunpack.c.l.b16 %v91
    %v144 = vunpack.c.l.b16 %v92
    %v145 = vunpack.c.l.b16 %v93
    %v146 = vunpack.c.l.b16 %v94
    %v147 = vunpack.c.l.b16 %v95
    %v148 = vunpack.c.l.b16 %v96
    %v149 = vunpack.c.l.b16 %v97
    %v150 = vunpack.c.l.b16 %v98
    %v151 = vunpack.c.l.b16 %v99
    %v152 = vunpack.c.l.b16 %v100
    %v153 = vunpack.c.l.b16 %v101
    %v154 = vunpack.c.l.b16 %v102
    %v155 = vpack.c.b16 %v140, %v139
    %v156 = vpack.c.b16 %v142, %v141
    %v157 = vpack.c.b16 %v144, %v143
    %v158 = vpack.c.b16 %v146, %v145
    %v159 = vpack.c.b16 %v148, %v147
    %v160 = vpack.c.b16 %v150, %v149
    %v161 = vpack.c.b16 %v152, %v151
    %v162 = vpack.c.b16 %v154, %v153
    %v187 = vunpack.c.l.b16 %v103
    %v188 = vunpack.c.l.b16 %v104
    %v189 = vunpack.c.l.b16 %v105
    %v190 = vunpack.c.l.b16 %v106
    %v191 = vunpack.c.l.b16 %v107
    %v192 = vunpack.c.l.b16 %v108
    %v193 = vunpack.c.l.b16 %v109
    %v194 = vunpack.c.l.b16 %v110
    %v195 = vunpack.c.l.b16 %v111
    %v196 = vunpack.c.l.b16 %v112
    %v197 = vunpack.c.l.b16 %v113
    %v198 = vunpack.c.l.b16 %v114
    %v199 = vunpack.c.l.b16 %v115
    %v200 = vunpack.c.l.b16 %v116
    %v201 = vunpack.c.l.b16 %v117
    %v202 = vunpack.c.l.b16 %v118
    %v203 = vpack.c.b16 %v188, %v187
    %v204 = vpack.c.b16 %v190, %v189
    %v205 = vpack.c.b16 %v192, %v191
    %v206 = vpack.c.b16 %v194, %v193
    %v207 = vpack.c.b16 %v196, %v195
    %v208 = vpack.c.b16 %v198, %v197
    %v209 = vpack.c.b16 %v200, %v199
    %v210 = vpack.c.b16 %v202, %v201
    %219 = vmatpush.bf16.msra.mxu0 %v210
    %220 = vmatpush.bf16.msra.mxu0 %v209
    %221 = vmatpush.bf16.msra.mxu0 %v208
    %222 = vmatpush.bf16.msra.mxu0 %v207
    %223 = vmatpush.bf16.msra.mxu0 %v206
    %224 = vmatpush.bf16.msra.mxu0 %v205
    %225 = vmatpush.bf16.msra.mxu0 %v204
    %226 = vmatpush.bf16.msra.mxu0 %v203
    %227 = vmatmul.bf16.gmra.mxu0 %v155
    %v228 = vpop.f32.mrf.mxu0
    %v229 = vadd.f32 %v121, %v228
    %v230 = vpop.f32.mrf.mxu0
    %v231 = vadd.f32 %v121, %v230
    %232 = vmatmul.bf16.gmra.mxu0 %v156
    %v233 = vpop.f32.mrf.mxu0
    %v234 = vadd.f32 %v121, %v233
    %v235 = vpop.f32.mrf.mxu0
    %v236 = vadd.f32 %v121, %v235
    %237 = vmatmul.bf16.gmra.mxu0 %v157
    %v238 = vpop.f32.mrf.mxu0
    %v239 = vadd.f32 %v121, %v238
    %v240 = vpop.f32.mrf.mxu0
    %v241 = vadd.f32 %v121, %v240
    %242 = vmatmul.bf16.gmra.mxu0 %v158
    %v243 = vpop.f32.mrf.mxu0
    %v244 = vadd.f32 %v121, %v243
    %v245 = vpop.f32.mrf.mxu0
    %v246 = vadd.f32 %v121, %v245
    %247 = vmatmul.bf16.gmra.mxu0 %v159
    %v248 = vpop.f32.mrf.mxu0
    %v249 = vadd.f32 %v121, %v248
    %v250 = vpop.f32.mrf.mxu0
    %v251 = vadd.f32 %v121, %v250
    %252 = vmatmul.bf16.gmra.mxu0 %v160
    %v253 = vpop.f32.mrf.mxu0
    %v254 = vadd.f32 %v121, %v253
    %v255 = vpop.f32.mrf.mxu0
    %v256 = vadd.f32 %v121, %v255
    %257 = vmatmul.bf16.gmra.mxu0 %v161
    %v258 = vpop.f32.mrf.mxu0
    %v259 = vadd.f32 %v121, %v258
    %v260 = vpop.f32.mrf.mxu0
    %v261 = vadd.f32 %v121, %v260
    %262 = vmatmul.bf16.gmra.mxu0 %v162
    %v263 = vpop.f32.mrf.mxu0
    %v264 = vadd.f32 %v121, %v263
    %v265 = vpop.f32.mrf.mxu0
    %v266 = vadd.f32 %v121, %v265
    %267 = vdwg.mxu0
    %v268 = vmul.f32 %v229, %v229
    %v269 = vmul.f32 %v231, %v231
    %v270 = vmul.f32 %v234, %v234
    %v271 = vmul.f32 %v236, %v236
    %v272 = vmul.f32 %v239, %v239
    %v273 = vmul.f32 %v241, %v241
    %v274 = vmul.f32 %v244, %v244
    %v275 = vmul.f32 %v246, %v246
    %v276 = vmul.f32 %v249, %v249
    %v277 = vmul.f32 %v251, %v251
    %v278 = vmul.f32 %v254, %v254
    %v279 = vmul.f32 %v256, %v256
    %v280 = vmul.f32 %v259, %v259
    %v281 = vmul.f32 %v261, %v261
    %v282 = vmul.f32 %v264, %v264
    %v283 = vmul.f32 %v266, %v266
    %v284 = vmul.f32 %v229, %v268
    %v285 = vmul.f32 %v231, %v269
    %v286 = vmul.f32 %v234, %v270
    %v287 = vmul.f32 %v236, %v271
    %v288 = vmul.f32 %v239, %v272
    %v289 = vmul.f32 %v241, %v273
    %v290 = vmul.f32 %v244, %v274
    %v291 = vmul.f32 %v246, %v275
    %v292 = vmul.f32 %v249, %v276
    %v293 = vmul.f32 %v251, %v277
    %v294 = vmul.f32 %v254, %v278
    %v295 = vmul.f32 %v256, %v279
    %v296 = vmul.f32 %v259, %v280
    %v297 = vmul.f32 %v261, %v281
    %v298 = vmul.f32 %v264, %v282
    %v299 = vmul.f32 %v266, %v283
    %v300 = vmul.f32 %v284, 0.044715
    %v301 = vmul.f32 %v285, 0.044715
    %v302 = vmul.f32 %v286, 0.044715
    %v303 = vmul.f32 %v287, 0.044715
    %v304 = vmul.f32 %v288, 0.044715
    %v305 = vmul.f32 %v289, 0.044715
    %v306 = vmul.f32 %v290, 0.044715
    %v307 = vmul.f32 %v291, 0.044715
    %v308 = vmul.f32 %v292, 0.044715
    %v309 = vmul.f32 %v293, 0.044715
    %v310 = vmul.f32 %v294, 0.044715
    %v311 = vmul.f32 %v295, 0.044715
    %v312 = vmul.f32 %v296, 0.044715
    %v313 = vmul.f32 %v297, 0.044715
    %v314 = vmul.f32 %v298, 0.044715
    %v315 = vmul.f32 %v299, 0.044715
    %v316 = vadd.f32 %v229, %v300
    %v317 = vadd.f32 %v231, %v301
    %v318 = vadd.f32 %v234, %v302
    %v319 = vadd.f32 %v236, %v303
    %v320 = vadd.f32 %v239, %v304
    %v321 = vadd.f32 %v241, %v305
    %v322 = vadd.f32 %v244, %v306
    %v323 = vadd.f32 %v246, %v307
    %v324 = vadd.f32 %v249, %v308
    %v325 = vadd.f32 %v251, %v309
    %v326 = vadd.f32 %v254, %v310
    %v327 = vadd.f32 %v256, %v311
    %v328 = vadd.f32 %v259, %v312
    %v329 = vadd.f32 %v261, %v313
    %v330 = vadd.f32 %v264, %v314
    %v331 = vadd.f32 %v266, %v315
    %v332 = vmul.f32 %v316, 0.7978846
    %v333 = vmul.f32 %v317, 0.7978846
    %v334 = vmul.f32 %v318, 0.7978846
    %v335 = vmul.f32 %v319, 0.7978846
    %v336 = vmul.f32 %v320, 0.7978846
    %v337 = vmul.f32 %v321, 0.7978846
    %v338 = vmul.f32 %v322, 0.7978846
    %v339 = vmul.f32 %v323, 0.7978846
    %v340 = vmul.f32 %v324, 0.7978846
    %v341 = vmul.f32 %v325, 0.7978846
    %v342 = vmul.f32 %v326, 0.7978846
    %v343 = vmul.f32 %v327, 0.7978846
    %v344 = vmul.f32 %v328, 0.7978846
    %v345 = vmul.f32 %v329, 0.7978846
    %v346 = vmul.f32 %v330, 0.7978846
    %v347 = vmul.f32 %v331, 0.7978846
    %v348 = vtanh.pop %v332
    %v349 = vtanh.pop %v333
    %v350 = vtanh.pop %v334
    %v351 = vtanh.pop %v335
    %v352 = vtanh.pop %v336
    %v353 = vtanh.pop %v337
    %v354 = vtanh.pop %v338
    %v355 = vtanh.pop %v339
    %v356 = vtanh.pop %v340
    %v357 = vtanh.pop %v341
    %v358 = vtanh.pop %v342
    %v359 = vtanh.pop %v343
    %v360 = vtanh.pop %v344
    %v361 = vtanh.pop %v345
    %v362 = vtanh.pop %v346
    %v363 = vtanh.pop %v347
    %v364 = vadd.f32 %v348, 1.0
    %v365 = vadd.f32 %v349, 1.0
    %v366 = vadd.f32 %v350, 1.0
    %v367 = vadd.f32 %v351, 1.0
    %v368 = vadd.f32 %v352, 1.0
    %v369 = vadd.f32 %v353, 1.0
    %v370 = vadd.f32 %v354, 1.0
    %v371 = vadd.f32 %v355, 1.0
    %v372 = vadd.f32 %v356, 1.0
    %v373 = vadd.f32 %v357, 1.0
    %v374 = vadd.f32 %v358, 1.0
    %v375 = vadd.f32 %v359, 1.0
    %v376 = vadd.f32 %v360, 1.0
    %v377 = vadd.f32 %v361, 1.0
    %v378 = vadd.f32 %v362, 1.0
    %v379 = vadd.f32 %v363, 1.0
    %v380 = vmul.f32 %v364, 0.5
    %v381 = vmul.f32 %v365, 0.5
    %v382 = vmul.f32 %v366, 0.5
    %v383 = vmul.f32 %v367, 0.5
    %v384 = vmul.f32 %v368, 0.5
    %v385 = vmul.f32 %v369, 0.5
    %v386 = vmul.f32 %v370, 0.5
    %v387 = vmul.f32 %v371, 0.5
    %v388 = vmul.f32 %v372, 0.5
    %v389 = vmul.f32 %v373, 0.5
    %v390 = vmul.f32 %v374, 0.5
    %v391 = vmul.f32 %v375, 0.5
    %v392 = vmul.f32 %v376, 0.5
    %v393 = vmul.f32 %v377, 0.5
    %v394 = vmul.f32 %v378, 0.5
    %v395 = vmul.f32 %v379, 0.5
    %v396 = vmul.f32 %v229, %v380
    %v397 = vmul.f32 %v231, %v381
    %v398 = vmul.f32 %v234, %v382
    %v399 = vmul.f32 %v236, %v383
    %v400 = vmul.f32 %v239, %v384
    %v401 = vmul.f32 %v241, %v385
    %v402 = vmul.f32 %v244, %v386
    %v403 = vmul.f32 %v246, %v387
    %v404 = vmul.f32 %v249, %v388
    %v405 = vmul.f32 %v251, %v389
    %v406 = vmul.f32 %v254, %v390
    %v407 = vmul.f32 %v256, %v391
    %v408 = vmul.f32 %v259, %v392
    %v409 = vmul.f32 %v261, %v393
    %v410 = vmul.f32 %v264, %v394
    %v411 = vmul.f32 %v266, %v395
    %v412 = vpack.c.bf16 %v397, %v396
    %v413 = vpack.c.bf16 %v399, %v398
    %v414 = vpack.c.bf16 %v401, %v400
    %v415 = vpack.c.bf16 %v403, %v402
    %v416 = vpack.c.bf16 %v405, %v404
    %v417 = vpack.c.bf16 %v407, %v406
    %v418 = vpack.c.bf16 %v409, %v408
    %v419 = vpack.c.bf16 %v411, %v410
    %v420 = vld [vmem:[#allocation8] sm:$0xff]
    %v421 = vld [vmem:[#allocation8 + $0x8] sm:$0xf]
    %v422 = vld [vmem:[#allocation8 + $0xc] sm:$0xff]
    %v423 = vld [vmem:[#allocation8 + $0x14] sm:$0xf]
    %v424 = vld [vmem:[#allocation8 + $0x18] sm:$0xff]
    %v425 = vld [vmem:[#allocation8 + $0x20] sm:$0xf]
    %v426 = vld [vmem:[#allocation8 + $0x24] sm:$0xff]
    %v427 = vld [vmem:[#allocation8 + $0x2c] sm:$0xf]
    %v428 = vld [vmem:[#allocation8 + $0x30] sm:$0xff]
    %v429 = vld [vmem:[#allocation8 + $0x38] sm:$0xf]
    %v430 = vld [vmem:[#allocation8 + $0x3c] sm:$0xff]
    %v431 = vld [vmem:[#allocation8 + $0x44] sm:$0xf]
    %v432 = vld [vmem:[#allocation8 + $0x48] sm:$0xff]
    %v433 = vld [vmem:[#allocation8 + $0x50] sm:$0xf]
    %v434 = vld [vmem:[#allocation8 + $0x54] sm:$0xff]
    %v435 = vld [vmem:[#allocation8 + $0x5c] sm:$0xf]
    %v436 = vld [vmem:[#allocation8 + $0x60] sm:$0xff]
    %v437 = vld [vmem:[#allocation8 + $0x68] sm:$0xf]
    %v438 = vld [vmem:[#allocation8 + $0x6c] sm:$0xff]
    %v439 = vld [vmem:[#allocation8 + $0x74] sm:$0xf]
    %v440 = vld [vmem:[#allocation8 + $0x78] sm:$0xff]
    %v441 = vld [vmem:[#allocation8 + $0x80] sm:$0xf]
    %v442 = vld [vmem:[#allocation8 + $0x84] sm:$0xff]
    %v443 = vld [vmem:[#allocation8 + $0x8c] sm:$0xf]
    %v444 = vld [vmem:[#allocation8 + $0x90] sm:$0xff]
    %v445 = vld [vmem:[#allocation8 + $0x98] sm:$0xf]
    %v446 = vld [vmem:[#allocation8 + $0x9c] sm:$0xff]
    %v447 = vld [vmem:[#allocation8 + $0xa4] sm:$0xf]
    %v448 = vld [vmem:[#allocation8 + $0xa8] sm:$0xff]
    %v449 = vld [vmem:[#allocation8 + $0xb0] sm:$0xf]
    %v450 = vld [vmem:[#allocation8 + $0xb4] sm:$0xff]
    %v451 = vld [vmem:[#allocation8 + $0xbc] sm:$0xf]
    %v452 = vld [vmem:[%s5] sm:$0x7]
    %v454 = vperm.slane %v452, 0
    %v455 = vperm.slane %v452, 1
    %v456 = vperm.slane %v452, 2
    %v492 = vunpack.c.l.b16 %v420
    %v493 = vunpack.c.h.b16 %v420
    %v494 = vunpack.c.l.b16 %v421
    %v495 = vunpack.c.l.b16 %v422
    %v496 = vunpack.c.h.b16 %v422
    %v497 = vunpack.c.l.b16 %v423
    %v498 = vunpack.c.l.b16 %v424
    %v499 = vunpack.c.h.b16 %v424
    %v500 = vunpack.c.l.b16 %v425
    %v501 = vunpack.c.l.b16 %v426
    %v502 = vunpack.c.h.b16 %v426
    %v503 = vunpack.c.l.b16 %v427
    %v504 = vunpack.c.l.b16 %v428
    %v505 = vunpack.c.h.b16 %v428
    %v506 = vunpack.c.l.b16 %v429
    %v507 = vunpack.c.l.b16 %v430
    %v508 = vunpack.c.h.b16 %v430
    %v509 = vunpack.c.l.b16 %v431
    %v510 = vunpack.c.l.b16 %v432
    %v511 = vunpack.c.h.b16 %v432
    %v512 = vunpack.c.l.b16 %v433
    %v513 = vunpack.c.l.b16 %v434
    %v514 = vunpack.c.h.b16 %v434
    %v515 = vunpack.c.l.b16 %v435
    %v516 = vunpack.c.l.b16 %v436
    %v517 = vunpack.c.h.b16 %v436
    %v518 = vunpack.c.l.b16 %v437
    %v519 = vunpack.c.l.b16 %v438
    %v520 = vunpack.c.h.b16 %v438
    %v521 = vunpack.c.l.b16 %v439
    %v522 = vunpack.c.l.b16 %v440
    %v523 = vunpack.c.h.b16 %v440
    %v524 = vunpack.c.l.b16 %v441
    %v525 = vunpack.c.l.b16 %v442
    %v526 = vunpack.c.h.b16 %v442
    %v527 = vunpack.c.l.b16 %v443
    %v528 = vunpack.c.l.b16 %v444
    %v529 = vunpack.c.h.b16 %v444
    %v530 = vunpack.c.l.b16 %v445
    %v531 = vunpack.c.l.b16 %v446
    %v532 = vunpack.c.h.b16 %v446
    %v533 = vunpack.c.l.b16 %v447
    %v534 = vunpack.c.l.b16 %v448
    %v535 = vunpack.c.h.b16 %v448
    %v536 = vunpack.c.l.b16 %v449
    %v537 = vunpack.c.l.b16 %v450
    %v538 = vunpack.c.h.b16 %v450
    %v539 = vunpack.c.l.b16 %v451
    %v540 = vpack.c.b16 %v495, %v492
    %v541 = vpack.c.b16 %v496, %v493
    %v542 = vpack.c.b16 %v497, %v494
    %v543 = vpack.c.b16 %v501, %v498
    %v544 = vpack.c.b16 %v502, %v499
    %v545 = vpack.c.b16 %v503, %v500
    %v546 = vpack.c.b16 %v507, %v504
    %v547 = vpack.c.b16 %v508, %v505
    %v548 = vpack.c.b16 %v509, %v506
    %v549 = vpack.c.b16 %v513, %v510
    %v550 = vpack.c.b16 %v514, %v511
    %v551 = vpack.c.b16 %v515, %v512
    %v552 = vpack.c.b16 %v519, %v516
    %v553 = vpack.c.b16 %v520, %v517
    %v554 = vpack.c.b16 %v521, %v518
    %v555 = vpack.c.b16 %v525, %v522
    %v556 = vpack.c.b16 %v526, %v523
    %v557 = vpack.c.b16 %v527, %v524
    %v558 = vpack.c.b16 %v531, %v528
    %v559 = vpack.c.b16 %v532, %v529
    %v560 = vpack.c.b16 %v533, %v530
    %v561 = vpack.c.b16 %v537, %v534
    %v562 = vpack.c.b16 %v538, %v535
    %v563 = vpack.c.b16 %v539, %v536
    %588 = vmatpush.bf16.msra.mxu0 %v561
    %589 = vmatpush.bf16.msra.mxu0 %v558
    %590 = vmatpush.bf16.msra.mxu0 %v555
    %591 = vmatpush.bf16.msra.mxu0 %v552
    %592 = vmatpush.bf16.msra.mxu0 %v549
    %593 = vmatpush.bf16.msra.mxu0 %v546
    %594 = vmatpush.bf16.msra.mxu0 %v543
    %595 = vmatpush.bf16.msra.mxu0 %v540
    %596 = vmatmul.bf16.gmra.mxu0 %v412
    %v597 = vpop.f32.mrf.mxu0
    %v598 = vadd.f32 %v454, %v597
    %v599 = vpop.f32.mrf.mxu0
    %v600 = vadd.f32 %v454, %v599
    %601 = vmatmul.bf16.gmra.mxu0 %v413
    %v602 = vpop.f32.mrf.mxu0
    %v603 = vadd.f32 %v454, %v602
    %v604 = vpop.f32.mrf.mxu0
    %v605 = vadd.f32 %v454, %v604
    %606 = vmatmul.bf16.gmra.mxu0 %v414
    %v607 = vpop.f32.mrf.mxu0
    %v608 = vadd.f32 %v454, %v607
    %v609 = vpop.f32.mrf.mxu0
    %v610 = vadd.f32 %v454, %v609
    %611 = vmatmul.bf16.gmra.mxu0 %v415
    %v612 = vpop.f32.mrf.mxu0
    %v613 = vadd.f32 %v454, %v612
    %v614 = vpop.f32.mrf.mxu0
    %v615 = vadd.f32 %v454, %v614
    %616 = vmatmul.bf16.gmra.mxu0 %v416
    %v617 = vpop.f32.mrf.mxu0
    %v618 = vadd.f32 %v454, %v617
    %v619 = vpop.f32.mrf.mxu0
    %v620 = vadd.f32 %v454, %v619
    %621 = vmatmul.bf16.gmra.mxu0 %v417
    %v622 = vpop.f32.mrf.mxu0
    %v623 = vadd.f32 %v454, %v622
    %v624 = vpop.f32.mrf.mxu0
    %v625 = vadd.f32 %v454, %v624
    %626 = vmatmul.bf16.gmra.mxu0 %v418
    %v627 = vpop.f32.mrf.mxu0
    %v628 = vadd.f32 %v454, %v627
    %v629 = vpop.f32.mrf.mxu0
    %v630 = vadd.f32 %v454, %v629
    %631 = vmatmul.bf16.gmra.mxu0 %v419
    %v632 = vpop.f32.mrf.mxu0
    %v633 = vadd.f32 %v454, %v632
    %v634 = vpop.f32.mrf.mxu0
    %v635 = vadd.f32 %v454, %v634
    %636 = vdwg.mxu0
    %637 = vmatpush.bf16.msra.mxu0 %v562
    %638 = vmatpush.bf16.msra.mxu0 %v559
    %639 = vmatpush.bf16.msra.mxu0 %v556
    %640 = vmatpush.bf16.msra.mxu0 %v553
    %641 = vmatpush.bf16.msra.mxu0 %v550
    %642 = vmatpush.bf16.msra.mxu0 %v547
    %643 = vmatpush.bf16.msra.mxu0 %v544
    %644 = vmatpush.bf16.msra.mxu0 %v541
    %645 = vmatmul.bf16.gmra.mxu0 %v412
    %v646 = vpop.f32.mrf.mxu0
    %v647 = vadd.f32 %v455, %v646
    %v648 = vpop.f32.mrf.mxu0
    %v649 = vadd.f32 %v455, %v648
    %650 = vmatmul.bf16.gmra.mxu0 %v413
    %v651 = vpop.f32.mrf.mxu0
    %v652 = vadd.f32 %v455, %v651
    %v653 = vpop.f32.mrf.mxu0
    %v654 = vadd.f32 %v455, %v653
    %655 = vmatmul.bf16.gmra.mxu0 %v414
    %v656 = vpop.f32.mrf.mxu0
    %v657 = vadd.f32 %v455, %v656
    %v658 = vpop.f32.mrf.mxu0
    %v659 = vadd.f32 %v455, %v658
    %660 = vmatmul.bf16.gmra.mxu0 %v415
    %v661 = vpop.f32.mrf.mxu0
    %v662 = vadd.f32 %v455, %v661
    %v663 = vpop.f32.mrf.mxu0
    %v664 = vadd.f32 %v455, %v663
    %665 = vmatmul.bf16.gmra.mxu0 %v416
    %v666 = vpop.f32.mrf.mxu0
    %v667 = vadd.f32 %v455, %v666
    %v668 = vpop.f32.mrf.mxu0
    %v669 = vadd.f32 %v455, %v668
    %670 = vmatmul.bf16.gmra.mxu0 %v417
    %v671 = vpop.f32.mrf.mxu0
    %v672 = vadd.f32 %v455, %v671
    %v673 = vpop.f32.mrf.mxu0
    %v674 = vadd.f32 %v455, %v673
    %675 = vmatmul.bf16.gmra.mxu0 %v418
    %v676 = vpop.f32.mrf.mxu0
    %v677 = vadd.f32 %v455, %v676
    %v678 = vpop.f32.mrf.mxu0
    %v679 = vadd.f32 %v455, %v678
    %680 = vmatmul.bf16.gmra.mxu0 %v419
    %v681 = vpop.f32.mrf.mxu0
    %v682 = vadd.f32 %v455, %v681
    %v683 = vpop.f32.mrf.mxu0
    %v684 = vadd.f32 %v455, %v683
    %685 = vdwg.mxu0
    %686 = vmatpush.bf16.msra.mxu0 %v563
    %687 = vmatpush.bf16.msra.mxu0 %v560
    %688 = vmatpush.bf16.msra.mxu0 %v557
    %689 = vmatpush.bf16.msra.mxu0 %v554
    %690 = vmatpush.bf16.msra.mxu0 %v551
    %691 = vmatpush.bf16.msra.mxu0 %v548
    %692 = vmatpush.bf16.msra.mxu0 %v545
    %693 = vmatpush.bf16.msra.mxu0 %v542
    %694 = vmatmul.bf16.gmra.mxu0 %v412
    %v695 = vpop.f32.mrf.mxu0
    %v696 = vadd.f32 %v456, %v695
    %v697 = vpop.f32.mrf.mxu0
    %v698 = vadd.f32 %v456, %v697
    %699 = vmatmul.bf16.gmra.mxu0 %v413
    %v700 = vpop.f32.mrf.mxu0
    %v701 = vadd.f32 %v456, %v700
    %v702 = vpop.f32.mrf.mxu0
    %v703 = vadd.f32 %v456, %v702
    %704 = vmatmul.bf16.gmra.mxu0 %v414
    %v705 = vpop.f32.mrf.mxu0
    %v706 = vadd.f32 %v456, %v705
    %v707 = vpop.f32.mrf.mxu0
    %v708 = vadd.f32 %v456, %v707
    %709 = vmatmul.bf16.gmra.mxu0 %v415
    %v710 = vpop.f32.mrf.mxu0
    %v711 = vadd.f32 %v456, %v710
    %v712 = vpop.f32.mrf.mxu0
    %v713 = vadd.f32 %v456, %v712
    %714 = vmatmul.bf16.gmra.mxu0 %v416
    %v715 = vpop.f32.mrf.mxu0
    %v716 = vadd.f32 %v456, %v715
    %v717 = vpop.f32.mrf.mxu0
    %v718 = vadd.f32 %v456, %v717
    %719 = vmatmul.bf16.gmra.mxu0 %v417
    %v720 = vpop.f32.mrf.mxu0
    %v721 = vadd.f32 %v456, %v720
    %v722 = vpop.f32.mrf.mxu0
    %v723 = vadd.f32 %v456, %v722
    %724 = vmatmul.bf16.gmra.mxu0 %v418
    %v725 = vpop.f32.mrf.mxu0
    %v726 = vadd.f32 %v456, %v725
    %v727 = vpop.f32.mrf.mxu0
    %v728 = vadd.f32 %v456, %v727
    %729 = vmatmul.bf16.gmra.mxu0 %v419
    %v730 = vpop.f32.mrf.mxu0
    %v731 = vadd.f32 %v456, %v730
    %v732 = vpop.f32.mrf.mxu0
    %v733 = vadd.f32 %v456, %v732
    %734 = vdwg.mxu0
    %v735 = vld [vmem:[#allocation5] sm:$0xff]
    %v736 = vld [vmem:[#allocation5 + $0x8] sm:$0xf]
    %v737 = vld [vmem:[#allocation5 + $0xc] sm:$0xff]
    %v738 = vld [vmem:[#allocation5 + $0x14] sm:$0xf]
    %v739 = vld [vmem:[#allocation5 + $0x18] sm:$0xff]
    %v740 = vld [vmem:[#allocation5 + $0x20] sm:$0xf]
    %v741 = vld [vmem:[#allocation5 + $0x24] sm:$0xff]
    %v742 = vld [vmem:[#allocation5 + $0x2c] sm:$0xf]
    %v743 = vld [vmem:[#allocation5 + $0x30] sm:$0xff]
    %v744 = vld [vmem:[#allocation5 + $0x38] sm:$0xf]
    %v745 = vld [vmem:[#allocation5 + $0x3c] sm:$0xff]
    %v746 = vld [vmem:[#allocation5 + $0x44] sm:$0xf]
    %v747 = vld [vmem:[#allocation5 + $0x48] sm:$0xff]
    %v748 = vld [vmem:[#allocation5 + $0x50] sm:$0xf]
    %v749 = vld [vmem:[#allocation5 + $0x54] sm:$0xff]
    %v750 = vld [vmem:[#allocation5 + $0x5c] sm:$0xf]
    %v751 = vld [vmem:[#allocation5 + $0x60] sm:$0xff]
    %v752 = vld [vmem:[#allocation5 + $0x68] sm:$0xf]
    %v753 = vld [vmem:[#allocation5 + $0x6c] sm:$0xff]
    %v754 = vld [vmem:[#allocation5 + $0x74] sm:$0xf]
    %v755 = vld [vmem:[#allocation5 + $0x78] sm:$0xff]
    %v756 = vld [vmem:[#allocation5 + $0x80] sm:$0xf]
    %v757 = vld [vmem:[#allocation5 + $0x84] sm:$0xff]
    %v758 = vld [vmem:[#allocation5 + $0x8c] sm:$0xf]
    %v759 = vld [vmem:[#allocation5 + $0x90] sm:$0xff]
    %v760 = vld [vmem:[#allocation5 + $0x98] sm:$0xf]
    %v761 = vld [vmem:[#allocation5 + $0x9c] sm:$0xff]
    %v762 = vld [vmem:[#allocation5 + $0xa4] sm:$0xf]
    %v763 = vld [vmem:[#allocation5 + $0xa8] sm:$0xff]
    %v764 = vld [vmem:[#allocation5 + $0xb0] sm:$0xf]
    %v765 = vld [vmem:[#allocation5 + $0xb4] sm:$0xff]
    %v766 = vld [vmem:[#allocation5 + $0xbc] sm:$0xf]
    %v767 = vunpack.c.l.bf16 %v735
    %v768 = vunpack.c.h.bf16 %v735
    %v769 = vunpack.c.l.bf16 %v736
    %v770 = vunpack.c.l.bf16 %v737
    %v771 = vunpack.c.h.bf16 %v737
    %v772 = vunpack.c.l.bf16 %v738
    %v773 = vunpack.c.l.bf16 %v739
    %v774 = vunpack.c.h.bf16 %v739
    %v775 = vunpack.c.l.bf16 %v740
    %v776 = vunpack.c.l.bf16 %v741
    %v777 = vunpack.c.h.bf16 %v741
    %v778 = vunpack.c.l.bf16 %v742
    %v779 = vunpack.c.l.bf16 %v743
    %v780 = vunpack.c.h.bf16 %v743
    %v781 = vunpack.c.l.bf16 %v744
    %v782 = vunpack.c.l.bf16 %v745
    %v783 = vunpack.c.h.bf16 %v745
    %v784 = vunpack.c.l.bf16 %v746
    %v785 = vunpack.c.l.bf16 %v747
    %v786 = vunpack.c.h.bf16 %v747
    %v787 = vunpack.c.l.bf16 %v748
    %v788 = vunpack.c.l.bf16 %v749
    %v789 = vunpack.c.h.bf16 %v749
    %v790 = vunpack.c.l.bf16 %v750
    %v791 = vunpack.c.l.bf16 %v751
    %v792 = vunpack.c.h.bf16 %v751
    %v793 = vunpack.c.l.bf16 %v752
    %v794 = vunpack.c.l.bf16 %v753
    %v795 = vunpack.c.h.bf16 %v753
    %v796 = vunpack.c.l.bf16 %v754
    %v797 = vunpack.c.l.bf16 %v755
    %v798 = vunpack.c.h.bf16 %v755
    %v799 = vunpack.c.l.bf16 %v756
    %v800 = vunpack.c.l.bf16 %v757
    %v801 = vunpack.c.h.bf16 %v757
    %v802 = vunpack.c.l.bf16 %v758
    %v803 = vunpack.c.l.bf16 %v759
    %v804 = vunpack.c.h.bf16 %v759
    %v805 = vunpack.c.l.bf16 %v760
    %v806 = vunpack.c.l.bf16 %v761
    %v807 = vunpack.c.h.bf16 %v761
    %v808 = vunpack.c.l.bf16 %v762
    %v809 = vunpack.c.l.bf16 %v763
    %v810 = vunpack.c.h.bf16 %v763
    %v811 = vunpack.c.l.bf16 %v764
    %v812 = vunpack.c.l.bf16 %v765
    %v813 = vunpack.c.h.bf16 %v765
    %v814 = vunpack.c.l.bf16 %v766
    %v815 = vmul.f32 %v767, %v598
    %v816 = vmul.f32 %v768, %v647
    %v817 = vmul.f32 %v769, %v696
    %v818 = vmul.f32 %v770, %v600
    %v819 = vmul.f32 %v771, %v649
    %v820 = vmul.f32 %v772, %v698
    %v821 = vmul.f32 %v773, %v603
    %v822 = vmul.f32 %v774, %v652
    %v823 = vmul.f32 %v775, %v701
    %v824 = vmul.f32 %v776, %v605
    %v825 = vmul.f32 %v777, %v654
    %v826 = vmul.f32 %v778, %v703
    %v827 = vmul.f32 %v779, %v608
    %v828 = vmul.f32 %v780, %v657
    %v829 = vmul.f32 %v781, %v706
    %v830 = vmul.f32 %v782, %v610
    %v831 = vmul.f32 %v783, %v659
    %v832 = vmul.f32 %v784, %v708
    %v833 = vmul.f32 %v785, %v613
    %v834 = vmul.f32 %v786, %v662
    %v835 = vmul.f32 %v787, %v711
    %v836 = vmul.f32 %v788, %v615
    %v837 = vmul.f32 %v789, %v664
    %v838 = vmul.f32 %v790, %v713
    %v839 = vmul.f32 %v791, %v618
    %v840 = vmul.f32 %v792, %v667
    %v841 = vmul.f32 %v793, %v716
    %v842 = vmul.f32 %v794, %v620
    %v843 = vmul.f32 %v795, %v669
    %v844 = vmul.f32 %v796, %v718
    %v845 = vmul.f32 %v797, %v623
    %v846 = vmul.f32 %v798, %v672
    %v847 = vmul.f32 %v799, %v721
    %v848 = vmul.f32 %v800, %v625
    %v849 = vmul.f32 %v801, %v674
    %v850 = vmul.f32 %v802, %v723
    %v851 = vmul.f32 %v803, %v628
    %v852 = vmul.f32 %v804, %v677
    %v853 = vmul.f32 %v805, %v726
    %v854 = vmul.f32 %v806, %v630
    %v855 = vmul.f32 %v807, %v679
    %v856 = vmul.f32 %v808, %v728
    %v857 = vmul.f32 %v809, %v633
    %v858 = vmul.f32 %v810, %v682
    %v859 = vmul.f32 %v811, %v731
    %v860 = vmul.f32 %v812, %v635
    %v861 = vmul.f32 %v813, %v684
    %v862 = vmul.f32 %v814, %v733
    %v863 = vadd.f32 %v815, %v816
    %v864 = vadd.f32 %v863, %v817
    %865 = vadd.xlane.f32.xlu0 %v864
    %v866 = vpop.xlane.xlu0 %865
    %v867 = vadd.f32 %v818, %v819
    %v868 = vadd.f32 %v867, %v820
    %869 = vadd.xlane.f32.xlu0 %v868
    %v870 = vpop.xlane.xlu0 %869
    %v871 = vadd.f32 %v821, %v822
    %v872 = vadd.f32 %v871, %v823
    %873 = vadd.xlane.f32.xlu0 %v872
    %v874 = vpop.xlane.xlu0 %873
    %v875 = vadd.f32 %v824, %v825
    %v876 = vadd.f32 %v875, %v826
    %877 = vadd.xlane.f32.xlu0 %v876
    %v878 = vpop.xlane.xlu0 %877
    %v879 = vadd.f32 %v827, %v828
    %v880 = vadd.f32 %v879, %v829
    %881 = vadd.xlane.f32.xlu0 %v880
    %v882 = vpop.xlane.xlu0 %881
    %v883 = vadd.f32 %v830, %v831
    %v884 = vadd.f32 %v883, %v832
    %885 = vadd.xlane.f32.xlu0 %v884
    %v886 = vpop.xlane.xlu0 %885
    %v887 = vadd.f32 %v833, %v834
    %v888 = vadd.f32 %v887, %v835
    %889 = vadd.xlane.f32.xlu0 %v888
    %v890 = vpop.xlane.xlu0 %889
    %v891 = vadd.f32 %v836, %v837
    %v892 = vadd.f32 %v891, %v838
    %893 = vadd.xlane.f32.xlu0 %v892
    %v894 = vpop.xlane.xlu0 %893
    %v895 = vadd.f32 %v839, %v840
    %v896 = vadd.f32 %v895, %v841
    %897 = vadd.xlane.f32.xlu0 %v896
    %v898 = vpop.xlane.xlu0 %897
    %v899 = vadd.f32 %v842, %v843
    %v900 = vadd.f32 %v899, %v844
    %901 = vadd.xlane.f32.xlu0 %v900
    %v902 = vpop.xlane.xlu0 %901
    %v903 = vadd.f32 %v845, %v846
    %v904 = vadd.f32 %v903, %v847
    %905 = vadd.xlane.f32.xlu0 %v904
    %v906 = vpop.xlane.xlu0 %905
    %v907 = vadd.f32 %v848, %v849
    %v908 = vadd.f32 %v907, %v850
    %909 = vadd.xlane.f32.xlu0 %v908
    %v910 = vpop.xlane.xlu0 %909
    %v911 = vadd.f32 %v851, %v852
    %v912 = vadd.f32 %v911, %v853
    %913 = vadd.xlane.f32.xlu0 %v912
    %v914 = vpop.xlane.xlu0 %913
    %v915 = vadd.f32 %v854, %v855
    %v916 = vadd.f32 %v915, %v856
    %917 = vadd.xlane.f32.xlu0 %v916
    %v918 = vpop.xlane.xlu0 %917
    %v919 = vadd.f32 %v857, %v858
    %v920 = vadd.f32 %v919, %v859
    %921 = vadd.xlane.f32.xlu0 %v920
    %v922 = vpop.xlane.xlu0 %921
    %v923 = vadd.f32 %v860, %v861
    %v924 = vadd.f32 %v923, %v862
    %925 = vadd.xlane.f32.xlu0 %v924
    %v926 = vpop.xlane.xlu0 %925
    %v927 = vmul.f32 %v767, %v767
    %v928 = vmul.f32 %v768, %v768
    %v929 = vmul.f32 %v769, %v769
    %v930 = vmul.f32 %v770, %v770
    %v931 = vmul.f32 %v771, %v771
    %v932 = vmul.f32 %v772, %v772
    %v933 = vmul.f32 %v773, %v773
    %v934 = vmul.f32 %v774, %v774
    %v935 = vmul.f32 %v775, %v775
    %v936 = vmul.f32 %v776, %v776
    %v937 = vmul.f32 %v777, %v777
    %v938 = vmul.f32 %v778, %v778
    %v939 = vmul.f32 %v779, %v779
    %v940 = vmul.f32 %v780, %v780
    %v941 = vmul.f32 %v781, %v781
    %v942 = vmul.f32 %v782, %v782
    %v943 = vmul.f32 %v783, %v783
    %v944 = vmul.f32 %v784, %v784
    %v945 = vmul.f32 %v785, %v785
    %v946 = vmul.f32 %v786, %v786
    %v947 = vmul.f32 %v787, %v787
    %v948 = vmul.f32 %v788, %v788
    %v949 = vmul.f32 %v789, %v789
    %v950 = vmul.f32 %v790, %v790
    %v951 = vmul.f32 %v791, %v791
    %v952 = vmul.f32 %v792, %v792
    %v953 = vmul.f32 %v793, %v793
    %v954 = vmul.f32 %v794, %v794
    %v955 = vmul.f32 %v795, %v795
    %v956 = vmul.f32 %v796, %v796
    %v957 = vmul.f32 %v797, %v797
    %v958 = vmul.f32 %v798, %v798
    %v959 = vmul.f32 %v799, %v799
    %v960 = vmul.f32 %v800, %v800
    %v961 = vmul.f32 %v801, %v801
    %v962 = vmul.f32 %v802, %v802
    %v963 = vmul.f32 %v803, %v803
    %v964 = vmul.f32 %v804, %v804
    %v965 = vmul.f32 %v805, %v805
    %v966 = vmul.f32 %v806, %v806
    %v967 = vmul.f32 %v807, %v807
    %v968 = vmul.f32 %v808, %v808
    %v969 = vmul.f32 %v809, %v809
    %v970 = vmul.f32 %v810, %v810
    %v971 = vmul.f32 %v811, %v811
    %v972 = vmul.f32 %v812, %v812
    %v973 = vmul.f32 %v813, %v813
    %v974 = vmul.f32 %v814, %v814
    %v975 = vadd.f32 %v927, %v928
    %v976 = vadd.f32 %v975, %v929
    %977 = vadd.xlane.f32.xlu0 %v976
    %v978 = vpop.xlane.xlu0 %977
    %v979 = vadd.f32 %v930, %v931
    %v980 = vadd.f32 %v979, %v932
    %981 = vadd.xlane.f32.xlu0 %v980
    %v982 = vpop.xlane.xlu0 %981
    %v983 = vadd.f32 %v933, %v934
    %v984 = vadd.f32 %v983, %v935
    %985 = vadd.xlane.f32.xlu0 %v984
    %v986 = vpop.xlane.xlu0 %985
    %v987 = vadd.f32 %v936, %v937
    %v988 = vadd.f32 %v987, %v938
    %989 = vadd.xlane.f32.xlu0 %v988
    %v990 = vpop.xlane.xlu0 %989
    %v991 = vadd.f32 %v939, %v940
    %v992 = vadd.f32 %v991, %v941
    %993 = vadd.xlane.f32.xlu0 %v992
    %v994 = vpop.xlane.xlu0 %993
    %v995 = vadd.f32 %v942, %v943
    %v996 = vadd.f32 %v995, %v944
    %997 = vadd.xlane.f32.xlu0 %v996
    %v998 = vpop.xlane.xlu0 %997
    %v999 = vadd.f32 %v945, %v946
    %v1000 = vadd.f32 %v999, %v947
    %1001 = vadd.xlane.f32.xlu0 %v1000
    %v1002 = vpop.xlane.xlu0 %1001
    %v1003 = vadd.f32 %v948, %v949
    %v1004 = vadd.f32 %v1003, %v950
    %1005 = vadd.xlane.f32.xlu0 %v1004
    %v1006 = vpop.xlane.xlu0 %1005
    %v1007 = vadd.f32 %v951, %v952
    %v1008 = vadd.f32 %v1007, %v953
    %1009 = vadd.xlane.f32.xlu0 %v1008
    %v1010 = vpop.xlane.xlu0 %1009
    %v1011 = vadd.f32 %v954, %v955
    %v1012 = vadd.f32 %v1011, %v956
    %1013 = vadd.xlane.f32.xlu0 %v1012
    %v1014 = vpop.xlane.xlu0 %1013
    %v1015 = vadd.f32 %v957, %v958
    %v1016 = vadd.f32 %v1015, %v959
    %1017 = vadd.xlane.f32.xlu0 %v1016
    %v1018 = vpop.xlane.xlu0 %1017
    %v1019 = vadd.f32 %v960, %v961
    %v1020 = vadd.f32 %v1019, %v962
    %1021 = vadd.xlane.f32.xlu0 %v1020
    %v1022 = vpop.xlane.xlu0 %1021
    %v1023 = vadd.f32 %v963, %v964
    %v1024 = vadd.f32 %v1023, %v965
    %1025 = vadd.xlane.f32.xlu0 %v1024
    %v1026 = vpop.xlane.xlu0 %1025
    %v1027 = vadd.f32 %v966, %v967
    %v1028 = vadd.f32 %v1027, %v968
    %1029 = vadd.xlane.f32.xlu0 %v1028
    %v1030 = vpop.xlane.xlu0 %1029
    %v1031 = vadd.f32 %v969, %v970
    %v1032 = vadd.f32 %v1031, %v971
    %1033 = vadd.xlane.f32.xlu0 %v1032
    %v1034 = vpop.xlane.xlu0 %1033
    %v1035 = vadd.f32 %v972, %v973
    %v1036 = vadd.f32 %v1035, %v974
    %1037 = vadd.xlane.f32.xlu0 %v1036
    %v1038 = vpop.xlane.xlu0 %1037
    %v1039 = vmul.f32 %v598, %v598
    %v1040 = vmul.f32 %v647, %v647
    %v1041 = vmul.f32 %v696, %v696
    %v1042 = vmul.f32 %v600, %v600
    %v1043 = vmul.f32 %v649, %v649
    %v1044 = vmul.f32 %v698, %v698
    %v1045 = vmul.f32 %v603, %v603
    %v1046 = vmul.f32 %v652, %v652
    %v1047 = vmul.f32 %v701, %v701
    %v1048 = vmul.f32 %v605, %v605
    %v1049 = vmul.f32 %v654, %v654
    %v1050 = vmul.f32 %v703, %v703
    %v1051 = vmul.f32 %v608, %v608
    %v1052 = vmul.f32 %v657, %v657
    %v1053 = vmul.f32 %v706, %v706
    %v1054 = vmul.f32 %v610, %v610
    %v1055 = vmul.f32 %v659, %v659
    %v1056 = vmul.f32 %v708, %v708
    %v1057 = vmul.f32 %v613, %v613
    %v1058 = vmul.f32 %v662, %v662
    %v1059 = vmul.f32 %v711, %v711
    %v1060 = vmul.f32 %v615, %v615
    %v1061 = vmul.f32 %v664, %v664
    %v1062 = vmul.f32 %v713, %v713
    %v1063 = vmul.f32 %v618, %v618
    %v1064 = vmul.f32 %v667, %v667
    %v1065 = vmul.f32 %v716, %v716
    %v1066 = vmul.f32 %v620, %v620
    %v1067 = vmul.f32 %v669, %v669
    %v1068 = vmul.f32 %v718, %v718
    %v1069 = vmul.f32 %v623, %v623
    %v1070 = vmul.f32 %v672, %v672
    %v1071 = vmul.f32 %v721, %v721
    %v1072 = vmul.f32 %v625, %v625
    %v1073 = vmul.f32 %v674, %v674
    %v1074 = vmul.f32 %v723, %v723
    %v1075 = vmul.f32 %v628, %v628
    %v1076 = vmul.f32 %v677, %v677
    %v1077 = vmul.f32 %v726, %v726
    %v1078 = vmul.f32 %v630, %v630
    %v1079 = vmul.f32 %v679, %v679
    %v1080 = vmul.f32 %v728, %v728
    %v1081 = vmul.f32 %v633, %v633
    %v1082 = vmul.f32 %v682, %v682
    %v1083 = vmul.f32 %v731, %v731
    %v1084 = vmul.f32 %v635, %v635
    %v1085 = vmul.f32 %v684, %v684
    %v1086 = vmul.f32 %v733, %v733
    %v1087 = vadd.f32 %v1039, %v1040
    %v1088 = vadd.f32 %v1087, %v1041
    %1089 = vadd.xlane.f32.xlu0 %v1088
    %v1090 = vpop.xlane.xlu0 %1089
    %v1091 = vadd.f32 %v1042, %v1043
    %v1092 = vadd.f32 %v1091, %v1044
    %1093 = vadd.xlane.f32.xlu0 %v1092
    %v1094 = vpop.xlane.xlu0 %1093
    %v1095 = vadd.f32 %v1045, %v1046
    %v1096 = vadd.f32 %v1095, %v1047
    %1097 = vadd.xlane.f32.xlu0 %v1096
    %v1098 = vpop.xlane.xlu0 %1097
    %v1099 = vadd.f32 %v1048, %v1049
    %v1100 = vadd.f32 %v1099, %v1050
    %1101 = vadd.xlane.f32.xlu0 %v1100
    %v1102 = vpop.xlane.xlu0 %1101
    %v1103 = vadd.f32 %v1051, %v1052
    %v1104 = vadd.f32 %v1103, %v1053
    %1105 = vadd.xlane.f32.xlu0 %v1104
    %v1106 = vpop.xlane.xlu0 %1105
    %v1107 = vadd.f32 %v1054, %v1055
    %v1108 = vadd.f32 %v1107, %v1056
    %1109 = vadd.xlane.f32.xlu0 %v1108
    %v1110 = vpop.xlane.xlu0 %1109
    %v1111 = vadd.f32 %v1057, %v1058
    %v1112 = vadd.f32 %v1111, %v1059
    %1113 = vadd.xlane.f32.xlu0 %v1112
    %v1114 = vpop.xlane.xlu0 %1113
    %v1115 = vadd.f32 %v1060, %v1061
    %v1116 = vadd.f32 %v1115, %v1062
    %1117 = vadd.xlane.f32.xlu0 %v1116
    %v1118 = vpop.xlane.xlu0 %1117
    %v1119 = vadd.f32 %v1063, %v1064
    %v1120 = vadd.f32 %v1119, %v1065
    %1121 = vadd.xlane.f32.xlu0 %v1120
    %v1122 = vpop.xlane.xlu0 %1121
    %v1123 = vadd.f32 %v1066, %v1067
    %v1124 = vadd.f32 %v1123, %v1068
    %1125 = vadd.xlane.f32.xlu0 %v1124
    %v1126 = vpop.xlane.xlu0 %1125
    %v1127 = vadd.f32 %v1069, %v1070
    %v1128 = vadd.f32 %v1127, %v1071
    %1129 = vadd.xlane.f32.xlu0 %v1128
    %v1130 = vpop.xlane.xlu0 %1129
    %v1131 = vadd.f32 %v1072, %v1073
    %v1132 = vadd.f32 %v1131, %v1074
    %1133 = vadd.xlane.f32.xlu0 %v1132
    %v1134 = vpop.xlane.xlu0 %1133
    %v1135 = vadd.f32 %v1075, %v1076
    %v1136 = vadd.f32 %v1135, %v1077
    %1137 = vadd.xlane.f32.xlu0 %v1136
    %v1138 = vpop.xlane.xlu0 %1137
    %v1139 = vadd.f32 %v1078, %v1079
    %v1140 = vadd.f32 %v1139, %v1080
    %1141 = vadd.xlane.f32.xlu0 %v1140
    %v1142 = vpop.xlane.xlu0 %1141
    %v1143 = vadd.f32 %v1081, %v1082
    %v1144 = vadd.f32 %v1143, %v1083
    %1145 = vadd.xlane.f32.xlu0 %v1144
    %v1146 = vpop.xlane.xlu0 %1145
    %v1147 = vadd.f32 %v1084, %v1085
    %v1148 = vadd.f32 %v1147, %v1086
    %1149 = vadd.xlane.f32.xlu0 %v1148
    %v1150 = vpop.xlane.xlu0 %1149
    %v1151 = vmul.f32 %v978, %v1090
    %v1152 = vmul.f32 %v982, %v1094
    %v1153 = vmul.f32 %v986, %v1098
    %v1154 = vmul.f32 %v990, %v1102
    %v1155 = vmul.f32 %v994, %v1106
    %v1156 = vmul.f32 %v998, %v1110
    %v1157 = vmul.f32 %v1002, %v1114
    %v1158 = vmul.f32 %v1006, %v1118
    %v1159 = vmul.f32 %v1010, %v1122
    %v1160 = vmul.f32 %v1014, %v1126
    %v1161 = vmul.f32 %v1018, %v1130
    %v1162 = vmul.f32 %v1022, %v1134
    %v1163 = vmul.f32 %v1026, %v1138
    %v1164 = vmul.f32 %v1030, %v1142
    %v1165 = vmul.f32 %v1034, %v1146
    %v1166 = vmul.f32 %v1038, %v1150
    %v1167 = vmax.f32 %v1151, 1e-24
    %v1168 = vmax.f32 %v1152, 1e-24
    %v1169 = vmax.f32 %v1153, 1e-24
    %v1170 = vmax.f32 %v1154, 1e-24
    %v1171 = vmax.f32 %v1155, 1e-24
    %v1172 = vmax.f32 %v1156, 1e-24
    %v1173 = vmax.f32 %v1157, 1e-24
    %v1174 = vmax.f32 %v1158, 1e-24
    %v1175 = vmax.f32 %v1159, 1e-24
    %v1176 = vmax.f32 %v1160, 1e-24
    %v1177 = vmax.f32 %v1161, 1e-24
    %v1178 = vmax.f32 %v1162, 1e-24
    %v1179 = vmax.f32 %v1163, 1e-24
    %v1180 = vmax.f32 %v1164, 1e-24
    %v1181 = vmax.f32 %v1165, 1e-24
    %v1182 = vmax.f32 %v1166, 1e-24
    %v1183 = vrsqrt.pop %v1167
    %v1184 = vmul.f32 %v1183, %v1167
    %v1185 = vmul.f32 %v1184, %v1183
    %v1186 = vmul.f32 0.5, %v1185
    %v1187 = vsub.f32 1.5, %v1186
    %v1188 = vmul.f32 %v1183, %v1187
    %vm1189 = vweird.f32 %v1167
    %vm1190 = vweird.f32 %v1183
    %vm1191 = vmor %vm1189, %vm1190
    %v1192 = vsel %vm1191, %v1183, %v1188
    %v1193 = vrsqrt.pop %v1168
    %v1194 = vmul.f32 %v1193, %v1168
    %v1195 = vmul.f32 %v1194, %v1193
    %v1196 = vmul.f32 0.5, %v1195
    %v1197 = vsub.f32 1.5, %v1196
    %v1198 = vmul.f32 %v1193, %v1197
    %vm1199 = vweird.f32 %v1168
    %vm1200 = vweird.f32 %v1193
    %vm1201 = vmor %vm1199, %vm1200
    %v1202 = vsel %vm1201, %v1193, %v1198
    %v1203 = vrsqrt.pop %v1169
    %v1204 = vmul.f32 %v1203, %v1169
    %v1205 = vmul.f32 %v1204, %v1203
    %v1206 = vmul.f32 0.5, %v1205
    %v1207 = vsub.f32 1.5, %v1206
    %v1208 = vmul.f32 %v1203, %v1207
    %vm1209 = vweird.f32 %v1169
    %vm1210 = vweird.f32 %v1203
    %vm1211 = vmor %vm1209, %vm1210
    %v1212 = vsel %vm1211, %v1203, %v1208
    %v1213 = vrsqrt.pop %v1170
    %v1214 = vmul.f32 %v1213, %v1170
    %v1215 = vmul.f32 %v1214, %v1213
    %v1216 = vmul.f32 0.5, %v1215
    %v1217 = vsub.f32 1.5, %v1216
    %v1218 = vmul.f32 %v1213, %v1217
    %vm1219 = vweird.f32 %v1170
    %vm1220 = vweird.f32 %v1213
    %vm1221 = vmor %vm1219, %vm1220
    %v1222 = vsel %vm1221, %v1213, %v1218
    %v1223 = vrsqrt.pop %v1171
    %v1224 = vmul.f32 %v1223, %v1171
    %v1225 = vmul.f32 %v1224, %v1223
    %v1226 = vmul.f32 0.5, %v1225
    %v1227 = vsub.f32 1.5, %v1226
    %v1228 = vmul.f32 %v1223, %v1227
    %vm1229 = vweird.f32 %v1171
    %vm1230 = vweird.f32 %v1223
    %vm1231 = vmor %vm1229, %vm1230
    %v1232 = vsel %vm1231, %v1223, %v1228
    %v1233 = vrsqrt.pop %v1172
    %v1234 = vmul.f32 %v1233, %v1172
    %v1235 = vmul.f32 %v1234, %v1233
    %v1236 = vmul.f32 0.5, %v1235
    %v1237 = vsub.f32 1.5, %v1236
    %v1238 = vmul.f32 %v1233, %v1237
    %vm1239 = vweird.f32 %v1172
    %vm1240 = vweird.f32 %v1233
    %vm1241 = vmor %vm1239, %vm1240
    %v1242 = vsel %vm1241, %v1233, %v1238
    %v1243 = vrsqrt.pop %v1173
    %v1244 = vmul.f32 %v1243, %v1173
    %v1245 = vmul.f32 %v1244, %v1243
    %v1246 = vmul.f32 0.5, %v1245
    %v1247 = vsub.f32 1.5, %v1246
    %v1248 = vmul.f32 %v1243, %v1247
    %vm1249 = vweird.f32 %v1173
    %vm1250 = vweird.f32 %v1243
    %vm1251 = vmor %vm1249, %vm1250
    %v1252 = vsel %vm1251, %v1243, %v1248
    %v1253 = vrsqrt.pop %v1174
    %v1254 = vmul.f32 %v1253, %v1174
    %v1255 = vmul.f32 %v1254, %v1253
    %v1256 = vmul.f32 0.5, %v1255
    %v1257 = vsub.f32 1.5, %v1256
    %v1258 = vmul.f32 %v1253, %v1257
    %vm1259 = vweird.f32 %v1174
    %vm1260 = vweird.f32 %v1253
    %vm1261 = vmor %vm1259, %vm1260
    %v1262 = vsel %vm1261, %v1253, %v1258
    %v1263 = vrsqrt.pop %v1175
    %v1264 = vmul.f32 %v1263, %v1175
    %v1265 = vmul.f32 %v1264, %v1263
    %v1266 = vmul.f32 0.5, %v1265
    %v1267 = vsub.f32 1.5, %v1266
    %v1268 = vmul.f32 %v1263, %v1267
    %vm1269 = vweird.f32 %v1175
    %vm1270 = vweird.f32 %v1263
    %vm1271 = vmor %vm1269, %vm1270
    %v1272 = vsel %vm1271, %v1263, %v1268
    %v1273 = vrsqrt.pop %v1176
    %v1274 = vmul.f32 %v1273, %v1176
    %v1275 = vmul.f32 %v1274, %v1273
    %v1276 = vmul.f32 0.5, %v1275
    %v1277 = vsub.f32 1.5, %v1276
    %v1278 = vmul.f32 %v1273, %v1277
    %vm1279 = vweird.f32 %v1176
    %vm1280 = vweird.f32 %v1273
    %vm1281 = vmor %vm1279, %vm1280
    %v1282 = vsel %vm1281, %v1273, %v1278
    %v1283 = vrsqrt.pop %v1177
    %v1284 = vmul.f32 %v1283, %v1177
    %v1285 = vmul.f32 %v1284, %v1283
    %v1286 = vmul.f32 0.5, %v1285
    %v1287 = vsub.f32 1.5, %v1286
    %v1288 = vmul.f32 %v1283, %v1287
    %vm1289 = vweird.f32 %v1177
    %vm1290 = vweird.f32 %v1283
    %vm1291 = vmor %vm1289, %vm1290
    %v1292 = vsel %vm1291, %v1283, %v1288
    %v1293 = vrsqrt.pop %v1178
    %v1294 = vmul.f32 %v1293, %v1178
    %v1295 = vmul.f32 %v1294, %v1293
    %v1296 = vmul.f32 0.5, %v1295
    %v1297 = vsub.f32 1.5, %v1296
    %v1298 = vmul.f32 %v1293, %v1297
    %vm1299 = vweird.f32 %v1178
    %vm1300 = vweird.f32 %v1293
    %vm1301 = vmor %vm1299, %vm1300
    %v1302 = vsel %vm1301, %v1293, %v1298
    %v1303 = vrsqrt.pop %v1179
    %v1304 = vmul.f32 %v1303, %v1179
    %v1305 = vmul.f32 %v1304, %v1303
    %v1306 = vmul.f32 0.5, %v1305
    %v1307 = vsub.f32 1.5, %v1306
    %v1308 = vmul.f32 %v1303, %v1307
    %vm1309 = vweird.f32 %v1179
    %vm1310 = vweird.f32 %v1303
    %vm1311 = vmor %vm1309, %vm1310
    %v1312 = vsel %vm1311, %v1303, %v1308
    %v1313 = vrsqrt.pop %v1180
    %v1314 = vmul.f32 %v1313, %v1180
    %v1315 = vmul.f32 %v1314, %v1313
    %v1316 = vmul.f32 0.5, %v1315
    %v1317 = vsub.f32 1.5, %v1316
    %v1318 = vmul.f32 %v1313, %v1317
    %vm1319 = vweird.f32 %v1180
    %vm1320 = vweird.f32 %v1313
    %vm1321 = vmor %vm1319, %vm1320
    %v1322 = vsel %vm1321, %v1313, %v1318
    %v1323 = vrsqrt.pop %v1181
    %v1324 = vmul.f32 %v1323, %v1181
    %v1325 = vmul.f32 %v1324, %v1323
    %v1326 = vmul.f32 0.5, %v1325
    %v1327 = vsub.f32 1.5, %v1326
    %v1328 = vmul.f32 %v1323, %v1327
    %vm1329 = vweird.f32 %v1181
    %vm1330 = vweird.f32 %v1323
    %vm1331 = vmor %vm1329, %vm1330
    %v1332 = vsel %vm1331, %v1323, %v1328
    %v1333 = vrsqrt.pop %v1182
    %v1334 = vmul.f32 %v1333, %v1182
    %v1335 = vmul.f32 %v1334, %v1333
    %v1336 = vmul.f32 0.5, %v1335
    %v1337 = vsub.f32 1.5, %v1336
    %v1338 = vmul.f32 %v1333, %v1337
    %vm1339 = vweird.f32 %v1182
    %vm1340 = vweird.f32 %v1333
    %vm1341 = vmor %vm1339, %vm1340
    %v1342 = vsel %vm1341, %v1333, %v1338
    %v1343 = vmul.f32 %v866, %v1192
    %v1344 = vmul.f32 %v870, %v1202
    %v1345 = vmul.f32 %v874, %v1212
    %v1346 = vmul.f32 %v878, %v1222
    %v1347 = vmul.f32 %v882, %v1232
    %v1348 = vmul.f32 %v886, %v1242
    %v1349 = vmul.f32 %v890, %v1252
    %v1350 = vmul.f32 %v894, %v1262
    %v1351 = vmul.f32 %v898, %v1272
    %v1352 = vmul.f32 %v902, %v1282
    %v1353 = vmul.f32 %v906, %v1292
    %v1354 = vmul.f32 %v910, %v1302
    %v1355 = vmul.f32 %v914, %v1312
    %v1356 = vmul.f32 %v918, %v1322
    %v1357 = vmul.f32 %v922, %v1332
    %v1358 = vmul.f32 %v926, %v1342
    %vm1359 = vcmask 7168
    %v1360 = vsel %vm1359, %v1343, 0.0
    %v1361 = vsel %vm1359, %v1344, 0.0
    %v1362 = vadd.f32 %v1360, %v1361
    %v1363 = vsel %vm1359, %v1345, 0.0
    %v1364 = vadd.f32 %v1362, %v1363
    %v1365 = vsel %vm1359, %v1346, 0.0
    %v1366 = vadd.f32 %v1364, %v1365
    %v1367 = vsel %vm1359, %v1347, 0.0
    %v1368 = vadd.f32 %v1366, %v1367
    %v1369 = vsel %vm1359, %v1348, 0.0
    %v1370 = vadd.f32 %v1368, %v1369
    %v1371 = vsel %vm1359, %v1349, 0.0
    %v1372 = vadd.f32 %v1370, %v1371
    %v1373 = vsel %vm1359, %v1350, 0.0
    %v1374 = vadd.f32 %v1372, %v1373
    %v1375 = vsel %vm1359, %v1351, 0.0
    %v1376 = vadd.f32 %v1374, %v1375
    %v1377 = vsel %vm1359, %v1352, 0.0
    %v1378 = vadd.f32 %v1376, %v1377
    %v1379 = vsel %vm1359, %v1353, 0.0
    %v1380 = vadd.f32 %v1378, %v1379
    %v1381 = vsel %vm1359, %v1354, 0.0
    %v1382 = vadd.f32 %v1380, %v1381
    %v1383 = vsel %vm1359, %v1355, 0.0
    %v1384 = vadd.f32 %v1382, %v1383
    %v1385 = vsel %vm1359, %v1356, 0.0
    %v1386 = vadd.f32 %v1384, %v1385
    %v1387 = vsel %vm1359, %v1357, 0.0
    %v1388 = vadd.f32 %v1386, %v1387
    %v1389 = vsel %vm1359, %v1358, 0.0
    %v1390 = vadd.f32 %v1388, %v1389
    %1391 = vadd.xlane.f32.xlu0 %v1390
    %v1392 = vpop.xlane.xlu0 %1391
    %v1393 = vrot.slane %v1392, 4
    %v1394 = vadd.f32 %v1392, %v1393
    %v1395 = vrot.slane %v1394, 2
    %v1396 = vadd.f32 %v1394, %v1395
    %v1397 = vrot.slane %v1396, 1
    %v1398 = vadd.f32 %v1396, %v1397
    %s1399 = vtos %v1398
    %s1400 = ssub.f32 0.0, %s1399
    %v1401 = vrcp.pop 128.0
    %v1402 = vmul.f32 128.0, %v1401
    %v1403 = vsub.f32 1.0, %v1402
    %v1404 = vmul.f32 %v1401, %v1403
    %v1405 = vadd.f32 %v1401, %v1404
    %vm1406 = vweird.f32 %v1401
    %v1407 = vsel %vm1406, %v1401, %v1405
    %s1408 = vtos %v1407
    %s1409 = smul.f32 %s1400, %s1408
    %s1410 = scalar_lea.smem [#allocation10], 0
    %1411 = sst [smem:[%s1410]] %s1409
    // Predicated region
    $region42: #{tpu_custom_call.1} parent=1 // pred_check
      _
    $region43: #{tpu_custom_call.1} parent=1 // pred_check_branch
      %1413 = sbr.rel (0) target = $region45
    $region44: #{tpu_custom_call.1} parent=1 // pred_region
      %1415 = vsyncadd [#allocation4], 0
      %s1417 = sshll.u32 %s6, 4
      %s1418 = int_to_ptr.hbm [resolvable:$true] %s1417
      %1420 = dma.smem_to_hbm [#allocation10], 16, %s1418, [#allocation4]
    $region45: #{tpu_custom_call.1} parent=1 // pred_fallthru
      _
    // Predicated region
    $region46: #{tpu_custom_call.1} parent=1 // pred_check
      _
    $region47: #{tpu_custom_call.1} parent=1 // pred_check_branch
      %1422 = sbr.rel (0) target = $region49
    $region48: #{tpu_custom_call.1} parent=1 // pred_region
      %1424 = dma.done [#allocation4], 16
    $region49: #{tpu_custom_call.1} parent=1 // pred_fallthru
      _
    %1425 = sfence
    %1426 = vsyncpa [#allocation3], 1
    %1427 = vsyncpa [#allocation6], 1
    %1428 = vsyncpa [#allocation9], 1
    %1429 = vsyncpa [#allocation4], 1

</llo_original>
